<compile_context>
chip_gen: v6e
topology: v6e:2x2x1
jax: 0.10.0
libtpu: 0.0.40
codegen_flags: <defaults>
</compile_context>

<pallas_src>
import jax
import jax.numpy as jnp
from jax.experimental import pallas as pl
from jax.experimental.pallas import tpu as pltpu

_LANE = 128
_MAX_COLS_MULT = 64          # consider cols = 128 * k for k in [1, 64]  (<= 8192 lanes)


def _h_sigmoid_kernel(x_ref, o_ref):
    x = x_ref[...]
    y = jnp.clip(x + 3.0, 0.0, 6.0) / 6.0        # relu6(x + 3) / 6, in the input dtype
    o_ref[...] = y.astype(o_ref.dtype)


def _cdiv(a, b):
    return -(-a // b)


def _round_up(a, b):
    return _cdiv(a, b) * b


_CAPS_CACHE = None


def _tpu_caps():
    """(vmem_capacity_bytes, multi_tensorcore) with safe, conservative fallbacks."""
    global _CAPS_CACHE
    if _CAPS_CACHE is None:
        vmem = 64 * 1024 * 1024                  # conservative default (v7x-sized)
        try:
            info = pltpu.get_tpu_info()
            vmem = int(getattr(info, "vmem_capacity_bytes", vmem))
        except Exception:
            pass
        # v7x: 64 MiB VMEM per TensorCore, 2 TCs/chip.  v5e/v6e: 128 MiB, 1 TC.
        multi_tc = vmem <= 96 * 1024 * 1024
        _CAPS_CACHE = (vmem, multi_tc)
    return _CAPS_CACHE


def _pick_cols(n, pack):
    """Largest cols = 128*k that divides n, preferring layouts with >= pack rows."""
    best_exact = None
    kmax = min(_MAX_COLS_MULT, n // _LANE)
    for k in range(kmax, 0, -1):
        c = k * _LANE
        if n % c == 0:
            if best_exact is None:
                best_exact = c               # widest exact reshape (few rows)
            if n // c >= pack:
                return c                     # widest exact reshape that is sublane-dense
    return best_exact                        # None => n not a multiple of 128 (ragged)


def h_sigmoid(x: jax.Array) -> jax.Array:
    """Elementwise hard-sigmoid. Any shape / float dtype; same shape/dtype out."""
    orig_shape = x.shape
    dtype = x.dtype
    n = int(x.size)
    if n == 0:                               # empty input: nothing to compute
        return x

    itemsize = jnp.dtype(dtype).itemsize
    # Sublane packing factor: 8 rows for 32-bit, 16 for bf16/fp16, 32 for 8-bit.
    pack = 8 * max(1, 4 // itemsize)

    _, multi_tc = _tpu_caps()
    if multi_tc:
        # v7x-like: faster HBM exposes per-step overhead -> bigger tiles, but only
        # 64 MiB physical VMEM per TC -> keep the scoped limit well below it.
        # Double-buffered in+out at 8 MiB tiles = 32 MiB <= 48 MiB.
        target_tile_bytes = 8 * 1024 * 1024
        vmem_limit = 48 * 1024 * 1024
    else:
        # v5e/v6e: 128 MiB physical VMEM, raise the (small) scoped default freely.
        target_tile_bytes = 4 * 1024 * 1024
        vmem_limit = 64 * 1024 * 1024

    # --- choose a lane-dense 2-D layout, avoiding padding whenever possible ----
    cols = _pick_cols(n, pack)
    if cols is not None:                     # fast path: pure metadata reshape, no pad
        rows = n // cols
        x2d = x.reshape(rows, cols)
        padded = False
    else:                                    # ragged tail: pad the flat view once
        # TODO(synk): replace the pad/slice round-trip with a manual-DMA ragged path
        # (memory_space=pl.ANY + pl.ds chunks) to cut the ~2 extra HBM passes.
        cols = 1024 if n >= 1024 * pack else _LANE
        rows = _cdiv(n, cols)
        total = rows * cols
        x2d = jnp.pad(x.reshape(-1), (0, total - n)).reshape(rows, cols)
        padded = True

    # --- tile size: ~4-8 MiB, pack-aligned rows, cdiv grid ----------------------
    row_bytes = cols * itemsize
    target_rows = max(pack, (target_tile_bytes // row_bytes) // pack * pack)
    if rows > target_rows:
        block_rows = target_rows
    elif multi_tc and rows >= 2 * pack and rows * row_bytes >= (1 << 20):
        # Fits in one tile, but on a 2-TensorCore chip split it so both TCs work.
        block_rows = _round_up(_cdiv(rows, 2), pack)
    else:
        block_rows = rows                    # block == full array dim: always legal

    num_blocks = _cdiv(rows, block_rows)
    if multi_tc and num_blocks > 2 and num_blocks % 2 == 1:
        # Prefer an even block count so neither TensorCore idles on the tail step.
        block_rows = max(pack, _round_up(_cdiv(rows, num_blocks + 1), pack))
        num_blocks = _cdiv(rows, block_rows)

    out2d = pl.pallas_call(
        _h_sigmoid_kernel,
        out_shape=jax.ShapeDtypeStruct((rows, cols), dtype),
        grid_spec=pltpu.PrefetchScalarGridSpec(
            num_scalar_prefetch=0,
            grid=(num_blocks,),
            in_specs=[pl.BlockSpec((block_rows, cols), lambda i: (i, 0))],
            out_specs=pl.BlockSpec((block_rows, cols), lambda i: (i, 0)),
        ),
        compiler_params=pltpu.CompilerParams(
            dimension_semantics=("parallel",),
            vmem_limit_bytes=vmem_limit,
        ),
        cost_estimate=pl.CostEstimate(
            flops=4 * rows * cols,
            transcendentals=0,
            bytes_accessed=2 * rows * cols * itemsize,
        ),
    )(x2d)

    if padded:
        return out2d.reshape(-1)[:n].reshape(orig_shape)
    return out2d.reshape(orig_shape)


if __name__ == "__main__":
    key, k1, k2, k3 = jax.random.split(jax.random.PRNGKey(0), 4)
    hsig = jax.jit(h_sigmoid)

    def ref(v):
        return jnp.clip(v + 3.0, 0.0, 6.0) / 6.0

    # Small NCHW input consistent with the module's typical use (fast path).
    x = jax.random.normal(k1, (2, 4, 16, 16), dtype=jnp.float32) * 4.0
    y = jax.block_until_ready(hsig(x))
    assert y.shape == x.shape and y.dtype == x.dtype
    assert jnp.allclose(y, ref(x), atol=1e-6), "f32 mismatch vs reference"

    # Ragged element count (exercises the padded fallback path).
    xr = jax.random.normal(k2, (2, 5, 7, 11), dtype=jnp.float32) * 4.0
    yr = jax.block_until_ready(hsig(xr))
    assert yr.shape == xr.shape and yr.dtype == xr.dtype
    assert jnp.allclose(yr, ref(xr), atol=1e-6), "ragged mismatch vs reference"

    # bf16 input (computation stays in the input dtype, matching PyTorch).
    xb = (jax.random.normal(k3, (2, 4, 16, 16), dtype=jnp.float32) * 4.0).astype(jnp.bfloat16)
    yb = jax.block_until_ready(hsig(xb))
    assert yb.shape == xb.shape and yb.dtype == jnp.bfloat16
    assert jnp.allclose(yb.astype(jnp.float32), ref(xb.astype(jnp.float32)), atol=2e-2), \
        "bf16 mismatch vs reference"

    print("KERNEL_OK")
</pallas_src>

<mosaic_0001>
module attributes {stable_mosaic.version = 11 : i64} {
  func.func @_h_sigmoid_kernel(%arg0: i32, %arg1: memref<8x256xf32, #tpu.memory_space<vmem>>, %arg2: memref<8x256xf32, #tpu.memory_space<vmem>>) attributes {dimension_semantics = [#tpu.dimension_semantics<parallel>], iteration_bounds = array<i64: 1>, scalar_prefetch = 0 : i64, scratch_operands = 0 : i64, tpu.core_type = #tpu.core_type<tc>, window_params = [{transform_indices = @transform_0, window_bounds = array<i64: 8, 256>}, {transform_indices = @transform_1, window_bounds = array<i64: 8, 256>}]} {
    %c0 = arith.constant 0 : index
    %c0_0 = arith.constant 0 : index
    %0 = vector.load %arg1[%c0, %c0_0] : memref<8x256xf32, #tpu.memory_space<vmem>>, vector<8x256xf32>
    %cst = arith.constant 3.000000e+00 : f32
    %1 = vector.broadcast %cst : f32 to vector<8x256xf32>
    %2 = arith.addf %0, %1 : vector<8x256xf32>
    %cst_1 = arith.constant 0.000000e+00 : f32
    %cst_2 = arith.constant 6.000000e+00 : f32
    %3 = vector.broadcast %cst_1 : f32 to vector<8x256xf32>
    %4 = arith.maximumf %3, %2 : vector<8x256xf32>
    %5 = vector.broadcast %cst_2 : f32 to vector<8x256xf32>
    %6 = arith.minimumf %5, %4 : vector<8x256xf32>
    %cst_3 = arith.constant 6.000000e+00 : f32
    %7 = vector.broadcast %cst_3 : f32 to vector<8x256xf32>
    %8 = arith.divf %6, %7 : vector<8x256xf32>
    %c0_4 = arith.constant 0 : index
    %c0_5 = arith.constant 0 : index
    %9 = vector.load %arg2[%c0_4, %c0_5] : memref<8x256xf32, #tpu.memory_space<vmem>>, vector<8x256xf32>
    tpu.vector_store %arg2[%c0_4, %c0_5], %8 {strides = array<i32>} : memref<8x256xf32, #tpu.memory_space<vmem>>, vector<8x256xf32>,
    return
  }
  func.func @transform_0(%arg0: i32) -> (i32, i32) {
    %c0_i32 = arith.constant 0 : i32
    %c0_i32_0 = arith.constant 0 : i32
    return %arg0, %c0_i32 : i32, i32
  }
  func.func @transform_1(%arg0: i32) -> (i32, i32) {
    %c0_i32 = arith.constant 0 : i32
    %c0_i32_0 = arith.constant 0 : i32
    return %arg0, %c0_i32 : i32, i32
  }
}

</mosaic_0001>

<llo_original>
// kernel: h_sigmoid.1
$region0: #{h_sigmoid.1}
  #allocation0 [shape = 'u32[]', space=smem, size = 0x4, offset = 0x4, fixed_abs, tag = 'smem constant byte address 0x4 - core index']
  #allocation1 [shape = 'u32[144,128]{1,0:T(1,128)}', space=vmem, size = 0x12000, scoped, tag = 'internal scratch']
  %s0 = inlined_call_operand.vmem [shape: f32[8,256], index: 0, kind: input, shape index: {}]
  %s1 = inlined_call_operand.vmem [shape: f32[8,256], index: 1, kind: output, shape index: {}]
  %s2 = sld [smem:[#allocation0]]
  $region14: #{h_sigmoid.1} parent=0
    _
  %s4 = ssub.s32 1, %s2
  %s5 = scalar_select 0, %s4, %s2
  // Predicated region
  $region2: #{h_sigmoid.1} parent=0 // pred_check
    _
  $region3: #{h_sigmoid.1} parent=0 // pred_check_branch
    %7 = sbr.rel (0) target = $region5
  $region4: #{h_sigmoid.1} parent=0 // pred_region
    _
  $region5: #{h_sigmoid.1} parent=0 // pred_fallthru
    _
  %v8 = vld [vmem:[%s0] sm:$0xff]
  %v9 = vld [vmem:[%s0 + $0x8] sm:$0xff]
  %v10 = vadd.f32 %v8, 3.0
  %v11 = vadd.f32 %v9, 3.0
  %v12 = vmax.f32 %v10, 0.0
  %v13 = vmax.f32 %v11, 0.0
  %v14 = vmin.f32 %v12, 6.0
  %v15 = vmin.f32 %v13, 6.0
  %v16 = vrcp.pop 6.0
  %v17 = vmul.f32 %v14, %v16
  %v18 = vmul.f32 %v15, %v16
  %19 = vst [vmem:[%s1] sm:$0xff] %v17
  %20 = vst [vmem:[%s1 + $0x8] sm:$0xff] %v18
  // Predicated region
  $region6: #{h_sigmoid.1} parent=0 // pred_check
    _
  $region7: #{h_sigmoid.1} parent=0 // pred_check_branch
    %22 = sbr.rel (0) target = $region9
  $region8: #{h_sigmoid.1} parent=0 // pred_region
    _
  $region9: #{h_sigmoid.1} parent=0 // pred_fallthru
    _
  // Predicated region
  $region10: #{h_sigmoid.1} parent=0 // pred_check
    _
  $region11: #{h_sigmoid.1} parent=0 // pred_check_branch
    %24 = sbr.rel (0) target = $region13
  $region12: #{h_sigmoid.1} parent=0 // pred_region
    _
  $region13: #{h_sigmoid.1} parent=0 // pred_fallthru
    _

</llo_original>
